<compile_context>
chip_gen: v5e
topology: v5e:2x2
jax: 0.10.0
libtpu: 0.0.40
codegen_flags: <defaults>
</compile_context>

<pallas_src>
import functools

import jax
import jax.numpy as jnp
from jax.experimental import pallas as pl
from jax.experimental.pallas import tpu as pltpu


def _value_loss_kernel(values_ref, old_values_ref, advantage_ref, mask_ref,
                       num_ref, den_ref, num_acc, den_acc, *, clip_eps: float):
    i = pl.program_id(1)  # block index within this shard (reduction axis)

    @pl.when(i == 0)
    def _init():
        num_acc[...] = jnp.zeros_like(num_acc)
        den_acc[...] = jnp.zeros_like(den_acc)

    v = values_ref[...].astype(jnp.float32)
    ov = old_values_ref[...].astype(jnp.float32)
    adv = advantage_ref[...].astype(jnp.float32)
    mask = mask_ref[...].astype(jnp.float32)

    # Same op ordering as the PyTorch module (bit-faithful per element).
    returns = adv + ov
    values_clipped = ov + jnp.clip(v - ov, -clip_eps, clip_eps)
    surr1 = (values_clipped - returns) ** 2
    surr2 = (v - returns) ** 2
    per_elem = jnp.maximum(surr1, surr2)

    # VPU-only elementwise accumulation per tile (no per-tile XLU reduce).
    num_acc[...] += per_elem * mask
    den_acc[...] += mask

    @pl.when(i == pl.num_programs(1) - 1)
    def _finalize():
        # One sublane (XLU) reduce per shard; the lane reduce + divide happen in
        # the wrapper on the tiny (1, num_shards*LW) partial outputs.
        num_ref[...] = jnp.sum(num_acc[...], axis=0, keepdims=True)
        den_ref[...] = jnp.sum(den_acc[...], axis=0, keepdims=True)


@functools.partial(
    jax.jit,
    static_argnames=("clip_eps", "lane_width", "rows_per_tile", "num_shards"),
)
def value_loss(values, old_values, advantage, action_mask,
               clip_eps: float = 0.2, *,
               lane_width: int = 512, rows_per_tile: int = 512,
               num_shards: int = 2):
    """Pallas implementation of ColossalChat ValueLoss.forward.

    values, old_values, advantage, action_mask: arrays of identical shape
    (e.g. [B, S]). Returns a scalar float32 loss.
    """
    assert values.shape == old_values.shape == advantage.shape == action_mask.shape

    n = int(values.size)

    # Bool masks -> int8 to cut HBM traffic (kernel upcasts to f32).
    mask = action_mask
    if mask.dtype == jnp.bool_:
        mask = mask.astype(jnp.int8)

    # Lane-dense layout: (rows, lw) with lw a multiple of 128.
    lw = lane_width if n >= lane_width * 8 else 128
    r = -(-n // lw)

    # Tile rows: keep a multiple of 32 (covers f32/bf16/int8 sublane packing),
    # sized so 4 inputs x 2 buffers + 2 f32 accumulators fit the default
    # scoped-VMEM limit on every generation (<= ~10 MiB at 512x512 f32).
    tm = rows_per_tile
    while tm > 32 and r < num_shards * tm:
        tm //= 2
    blocks = -(-r // (num_shards * tm))
    r_pad = num_shards * blocks * tm
    total = r_pad * lw

    def prep(x):
        x = jnp.ravel(x)
        if total != n:
            x = jnp.pad(x, (0, total - n))  # mask pads with 0 -> no contribution
        return x.reshape(r_pad, lw)

    v2, ov2, adv2, m2 = prep(values), prep(old_values), prep(advantage), prep(mask)

    row_map = lambda s, i: (s * blocks + i, 0)
    out_map = lambda s, i: (0, s)

    num_parts, den_parts = pl.pallas_call(
        functools.partial(_value_loss_kernel, clip_eps=float(clip_eps)),
        out_shape=(
            jax.ShapeDtypeStruct((1, num_shards * lw), jnp.float32),
            jax.ShapeDtypeStruct((1, num_shards * lw), jnp.float32),
        ),
        grid_spec=pltpu.PrefetchScalarGridSpec(
            num_scalar_prefetch=0,
            grid=(num_shards, blocks),
            in_specs=[pl.BlockSpec((tm, lw), row_map) for _ in range(4)],
            out_specs=(
                pl.BlockSpec((1, lw), out_map),
                pl.BlockSpec((1, lw), out_map),
            ),
            scratch_shapes=[
                pltpu.VMEM((tm, lw), jnp.float32),  # numerator accumulator
                pltpu.VMEM((tm, lw), jnp.float32),  # denominator accumulator
            ],
        ),
        compiler_params=pltpu.CompilerParams(
            dimension_semantics=("parallel", "arbitrary"),
        ),
    )(v2, ov2, adv2, m2)

    num_total = jnp.sum(num_parts)
    den_total = jnp.sum(den_parts)
    return 0.5 * num_total / den_total


def value_loss_ref(values, old_values, advantage, action_mask, clip_eps: float = 0.2):
    """Pure-JAX reference (mirrors the PyTorch module exactly)."""
    returns = advantage + old_values
    values_clipped = old_values + jnp.clip(values - old_values, -clip_eps, clip_eps)
    surr1 = (values_clipped - returns) ** 2
    surr2 = (values - returns) ** 2
    loss = jnp.maximum(surr1, surr2) / jnp.sum(action_mask)
    loss = jnp.sum(loss * action_mask)
    return 0.5 * loss


if __name__ == "__main__":
    # --- Test 1: tiny f32 problem (exercises padding + an all-padding shard) ---
    B, S = 2, 8
    k1, k2, k3, k4 = jax.random.split(jax.random.PRNGKey(0), 4)
    values = jax.random.normal(k1, (B, S), dtype=jnp.float32)
    old_values = jax.random.normal(k2, (B, S), dtype=jnp.float32)
    advantage = jax.random.normal(k3, (B, S), dtype=jnp.float32)
    action_mask = (jax.random.uniform(k4, (B, S)) > 0.3).astype(jnp.float32)

    out = jax.block_until_ready(value_loss(values, old_values, advantage, action_mask))
    ref = jax.block_until_ready(value_loss_ref(values, old_values, advantage, action_mask))
    assert jnp.allclose(out, ref, rtol=1e-5, atol=1e-6), (out, ref)

    # --- Test 2: larger bf16 problem (exercises the tiled multi-block pipeline,
    #     both grid shards, and the reduced-byte bf16/int8 input path) ---
    B2, S2 = 8, 131072
    j1, j2, j3, j4 = jax.random.split(jax.random.PRNGKey(1), 4)
    values2 = jax.random.normal(j1, (B2, S2), dtype=jnp.float32).astype(jnp.bfloat16)
    old2 = jax.random.normal(j2, (B2, S2), dtype=jnp.float32).astype(jnp.bfloat16)
    adv2 = jax.random.normal(j3, (B2, S2), dtype=jnp.float32).astype(jnp.bfloat16)
    mask2 = jax.random.uniform(j4, (B2, S2)) > 0.3  # bool -> shipped as int8

    out2 = jax.block_until_ready(value_loss(values2, old2, adv2, mask2))
    ref2 = jax.block_until_ready(
        value_loss_ref(values2.astype(jnp.float32), old2.astype(jnp.float32),
                       adv2.astype(jnp.float32), mask2.astype(jnp.float32)))
    assert jnp.allclose(out2, ref2, rtol=2e-3, atol=1e-5), (out2, ref2)

    print("KERNEL_OK")
</pallas_src>

<mosaic_0001>
module attributes {stable_mosaic.version = 11 : i64} {
  func.func @_value_loss_kernel(%arg0: i32, %arg1: i32, %arg2: memref<32x128xf32, #tpu.memory_space<vmem>>, %arg3: memref<32x128xf32, #tpu.memory_space<vmem>>, %arg4: memref<32x128xf32, #tpu.memory_space<vmem>>, %arg5: memref<32x128xf32, #tpu.memory_space<vmem>>, %arg6: memref<1x128xf32, #tpu.memory_space<vmem>>, %arg7: memref<1x128xf32, #tpu.memory_space<vmem>>, %arg8: memref<32x128xf32, #tpu.memory_space<vmem>>, %arg9: memref<32x128xf32, #tpu.memory_space<vmem>>) attributes {dimension_semantics = [#tpu.dimension_semantics<parallel>, #tpu.dimension_semantics<arbitrary>], iteration_bounds = array<i64: 2, 1>, scalar_prefetch = 0 : i64, scratch_operands = 2 : i64, tpu.core_type = #tpu.core_type<tc>, window_params = [{transform_indices = @transform_0, window_bounds = array<i64: 32, 128>}, {transform_indices = @transform_1, window_bounds = array<i64: 32, 128>}, {transform_indices = @transform_2, window_bounds = array<i64: 32, 128>}, {transform_indices = @transform_3, window_bounds = array<i64: 32, 128>}, {transform_indices = @transform_4, window_bounds = array<i64: 1, 128>}, {transform_indices = @transform_5, window_bounds = array<i64: 1, 128>}]} {
    %c0_i32 = arith.constant 0 : i32
    %0 = arith.cmpi eq, %arg1, %c0_i32 : i32
    %1 = arith.extui %0 : i1 to i32
    %c0_i32_0 = arith.constant 0 : i32
    %2 = arith.cmpi ne, %1, %c0_i32_0 : i32
    scf.if %2 {
      %cst_19 = arith.constant 0.000000e+00 : f32
      %29 = vector.broadcast %cst_19 : f32 to vector<32x128xf32>
      %c0_20 = arith.constant 0 : index
      %c0_21 = arith.constant 0 : index
      %30 = vector.load %arg8[%c0_20, %c0_21] : memref<32x128xf32, #tpu.memory_space<vmem>>, vector<32x128xf32>
      tpu.vector_store %arg8[%c0_20, %c0_21], %29 {strides = array<i32>} : memref<32x128xf32, #tpu.memory_space<vmem>>, vector<32x128xf32>,
      %cst_22 = arith.constant 0.000000e+00 : f32
      %31 = vector.broadcast %cst_22 : f32 to vector<32x128xf32>
      %c0_23 = arith.constant 0 : index
      %c0_24 = arith.constant 0 : index
      %32 = vector.load %arg9[%c0_23, %c0_24] : memref<32x128xf32, #tpu.memory_space<vmem>>, vector<32x128xf32>
      tpu.vector_store %arg9[%c0_23, %c0_24], %31 {strides = array<i32>} : memref<32x128xf32, #tpu.memory_space<vmem>>, vector<32x128xf32>,
    } else {
    }
    %c0 = arith.constant 0 : index
    %c0_1 = arith.constant 0 : index
    %3 = vector.load %arg2[%c0, %c0_1] : memref<32x128xf32, #tpu.memory_space<vmem>>, vector<32x128xf32>
    %c0_2 = arith.constant 0 : index
    %c0_3 = arith.constant 0 : index
    %4 = vector.load %arg3[%c0_2, %c0_3] : memref<32x128xf32, #tpu.memory_space<vmem>>, vector<32x128xf32>
    %c0_4 = arith.constant 0 : index
    %c0_5 = arith.constant 0 : index
    %5 = vector.load %arg4[%c0_4, %c0_5] : memref<32x128xf32, #tpu.memory_space<vmem>>, vector<32x128xf32>
    %c0_6 = arith.constant 0 : index
    %c0_7 = arith.constant 0 : index
    %6 = vector.load %arg5[%c0_6, %c0_7] : memref<32x128xf32, #tpu.memory_space<vmem>>, vector<32x128xf32>
    %7 = arith.addf %5, %4 : vector<32x128xf32>
    %8 = arith.subf %3, %4 : vector<32x128xf32>
    %cst = arith.constant -2.000000e-01 : f32
    %cst_8 = arith.constant 2.000000e-01 : f32
    %9 = vector.broadcast %cst : f32 to vector<32x128xf32>
    %10 = arith.maximumf %9, %8 : vector<32x128xf32>
    %11 = vector.broadcast %cst_8 : f32 to vector<32x128xf32>
    %12 = arith.minimumf %11, %10 : vector<32x128xf32>
    %13 = arith.addf %4, %12 : vector<32x128xf32>
    %14 = arith.subf %13, %7 : vector<32x128xf32>
    %15 = arith.mulf %14, %14 : vector<32x128xf32>
    %16 = arith.subf %3, %7 : vector<32x128xf32>
    %17 = arith.mulf %16, %16 : vector<32x128xf32>
    %18 = arith.maximumf %15, %17 : vector<32x128xf32>
    %c0_9 = arith.constant 0 : index
    %c0_10 = arith.constant 0 : index
    %19 = vector.load %arg8[%c0_9, %c0_10] : memref<32x128xf32, #tpu.memory_space<vmem>>, vector<32x128xf32>
    %20 = arith.mulf %18, %6 : vector<32x128xf32>
    %21 = arith.addf %19, %20 : vector<32x128xf32>
    %c0_11 = arith.constant 0 : index
    %c0_12 = arith.constant 0 : index
    %22 = vector.load %arg8[%c0_11, %c0_12] : memref<32x128xf32, #tpu.memory_space<vmem>>, vector<32x128xf32>
    tpu.vector_store %arg8[%c0_11, %c0_12], %21 {strides = array<i32>} : memref<32x128xf32, #tpu.memory_space<vmem>>, vector<32x128xf32>,
    %c0_13 = arith.constant 0 : index
    %c0_14 = arith.constant 0 : index
    %23 = vector.load %arg9[%c0_13, %c0_14] : memref<32x128xf32, #tpu.memory_space<vmem>>, vector<32x128xf32>
    %24 = arith.addf %23, %6 : vector<32x128xf32>
    %c0_15 = arith.constant 0 : index
    %c0_16 = arith.constant 0 : index
    %25 = vector.load %arg9[%c0_15, %c0_16] : memref<32x128xf32, #tpu.memory_space<vmem>>, vector<32x128xf32>
    tpu.vector_store %arg9[%c0_15, %c0_16], %24 {strides = array<i32>} : memref<32x128xf32, #tpu.memory_space<vmem>>, vector<32x128xf32>,
    %c0_i32_17 = arith.constant 0 : i32
    %26 = arith.cmpi eq, %arg1, %c0_i32_17 : i32
    %27 = arith.extui %26 : i1 to i32
    %c0_i32_18 = arith.constant 0 : i32
    %28 = arith.cmpi ne, %27, %c0_i32_18 : i32
    scf.if %28 {
      %c0_19 = arith.constant 0 : index
      %c0_20 = arith.constant 0 : index
      %29 = vector.load %arg8[%c0_19, %c0_20] : memref<32x128xf32, #tpu.memory_space<vmem>>, vector<32x128xf32>
      %cst_21 = arith.constant dense<0.000000e+00> : vector<128xf32>
      %30 = vector.multi_reduction <add>, %29, %cst_21 [0] : vector<32x128xf32> to vector<128xf32>
      %31 = vector.shape_cast %30 : vector<128xf32> to vector<1x128xf32>
      %c0_22 = arith.constant 0 : index
      %c0_23 = arith.constant 0 : index
      %32 = vector.load %arg6[%c0_22, %c0_23] : memref<1x128xf32, #tpu.memory_space<vmem>>, vector<1x128xf32>
      tpu.vector_store %arg6[%c0_22, %c0_23], %31 {strides = array<i32>} : memref<1x128xf32, #tpu.memory_space<vmem>>, vector<1x128xf32>,
      %c0_24 = arith.constant 0 : index
      %c0_25 = arith.constant 0 : index
      %33 = vector.load %arg9[%c0_24, %c0_25] : memref<32x128xf32, #tpu.memory_space<vmem>>, vector<32x128xf32>
      %cst_26 = arith.constant dense<0.000000e+00> : vector<128xf32>
      %34 = vector.multi_reduction <add>, %33, %cst_26 [0] : vector<32x128xf32> to vector<128xf32>
      %35 = vector.shape_cast %34 : vector<128xf32> to vector<1x128xf32>
      %c0_27 = arith.constant 0 : index
      %c0_28 = arith.constant 0 : index
      %36 = vector.load %arg7[%c0_27, %c0_28] : memref<1x128xf32, #tpu.memory_space<vmem>>, vector<1x128xf32>
      tpu.vector_store %arg7[%c0_27, %c0_28], %35 {strides = array<i32>} : memref<1x128xf32, #tpu.memory_space<vmem>>, vector<1x128xf32>,
    } else {
    }
    return
  }
  func.func @transform_0(%arg0: i32, %arg1: i32) -> (i32, i32) {
    %c1_i32 = arith.constant 1 : i32
    %0 = arith.muli %arg0, %c1_i32 : i32
    %1 = arith.addi %0, %arg1 : i32
    %c0_i32 = arith.constant 0 : i32
    %c0_i32_0 = arith.constant 0 : i32
    return %1, %c0_i32 : i32, i32
  }
  func.func @transform_1(%arg0: i32, %arg1: i32) -> (i32, i32) {
    %c1_i32 = arith.constant 1 : i32
    %0 = arith.muli %arg0, %c1_i32 : i32
    %1 = arith.addi %0, %arg1 : i32
    %c0_i32 = arith.constant 0 : i32
    %c0_i32_0 = arith.constant 0 : i32
    return %1, %c0_i32 : i32, i32
  }
  func.func @transform_2(%arg0: i32, %arg1: i32) -> (i32, i32) {
    %c1_i32 = arith.constant 1 : i32
    %0 = arith.muli %arg0, %c1_i32 : i32
    %1 = arith.addi %0, %arg1 : i32
    %c0_i32 = arith.constant 0 : i32
    %c0_i32_0 = arith.constant 0 : i32
    return %1, %c0_i32 : i32, i32
  }
  func.func @transform_3(%arg0: i32, %arg1: i32) -> (i32, i32) {
    %c1_i32 = arith.constant 1 : i32
    %0 = arith.muli %arg0, %c1_i32 : i32
    %1 = arith.addi %0, %arg1 : i32
    %c0_i32 = arith.constant 0 : i32
    %c0_i32_0 = arith.constant 0 : i32
    return %1, %c0_i32 : i32, i32
  }
  func.func @transform_4(%arg0: i32, %arg1: i32) -> (i32, i32) {
    %c0_i32 = arith.constant 0 : i32
    %c0_i32_0 = arith.constant 0 : i32
    return %c0_i32, %arg0 : i32, i32
  }
  func.func @transform_5(%arg0: i32, %arg1: i32) -> (i32, i32) {
    %c0_i32 = arith.constant 0 : i32
    %c0_i32_0 = arith.constant 0 : i32
    return %c0_i32, %arg0 : i32, i32
  }
}

</mosaic_0001>

<llo_original>
// kernel: value_loss.1
$region0: #{value_loss.1}
  #allocation0 [shape = 'u32[]', space=smem, size = 0x4, offset = 0x4, fixed_abs, tag = 'smem constant byte address 0x4 - core index']
  #allocation1 [shape = 'u32[72,128]{1,0:T(1,128)}', space=vmem, size = 0x9000, scoped, tag = 'internal scratch']
  #allocation2 [shape = 'f32[32,128]{1,0:T(8,128)}', space=vmem, size = 0x4000, scoped, tag = 'scratch operand']
  #allocation3 [shape = 'f32[32,128]{1,0:T(8,128)}', space=vmem, size = 0x4000, scoped, tag = 'scratch operand']
  %s0 = inlined_call_operand.vmem [shape: f32[64,128], index: 0, kind: input, shape index: {}]
  %s1 = inlined_call_operand.vmem [shape: f32[64,128], index: 1, kind: input, shape index: {}]
  %s2 = inlined_call_operand.vmem [shape: f32[64,128], index: 2, kind: input, shape index: {}]
  %s3 = inlined_call_operand.vmem [shape: f32[64,128], index: 3, kind: input, shape index: {}]
  %s4 = inlined_call_operand.vmem [shape: f32[1,256], index: 4, kind: output, shape index: {0}]
  %s5 = inlined_call_operand.vmem [shape: f32[1,256], index: 5, kind: output, shape index: {1}]
  %6 = xla_tuple %s4, %s5
  %s7 = sld [smem:[#allocation0]]
  $region65: #{value_loss.1} parent=0
    _
  %s9 = ssub.s32 1, %s7
  %s10 = scalar_select 0, %s9, %s7
  loop: start=0, step=1, limit=4
  $region2: #{value_loss.1} parent=0 // loop_pre_header
    _
  $region3: #{value_loss.1} parent=0 // loop_header
    %s12 = sphi 0, %s16
    %p13 = scmp.ge.s32.totalorder %s12, 4
    %s19 = sphi 0, %s31
    %s20 = sphi 0, %s27
    %s21 = sphi 0, %s19
    %s22 = sphi 0, %s20
    %s23 = sphi 0, %s21
    %s24 = sphi 0, %s22
    %s36 = sphi 0, %s38
    %s39 = sphi 0, %s36
    %s40 = sphi 0, %s39
    %s56 = sphi 0, %s40
    %s64 = sphi 0, %s66
    %s67 = sphi 0, %s64
    %s68 = sphi 0, %s67
    %s84 = sphi 0, %s68
    %s92 = sphi 0, %s94
    %s95 = sphi 0, %s92
    %s96 = sphi 0, %s95
    %s112 = sphi 0, %s96
    %s120 = sphi 0, %s122
    %s123 = sphi 0, %s120
    %s124 = sphi 0, %s123
    %s140 = sphi 0, %s124
    %s146 = sphi 0, %s148
    %s149 = sphi 0, %s146
    %s150 = sphi 0, %s149
    %s166 = sphi 0, %s150
    %s172 = sphi 0, %s174
    %s175 = sphi 0, %s172
    %s176 = sphi 0, %s175
    %s192 = sphi 0, %s176
  $region4: #{value_loss.1} parent=0 // loop_header_branch
    %15 = sbr.rel (%p13) target = $region8
  $region5: #{value_loss.1} parent=0 // loop_body
    %s17 = ssub.s32 %s12, 1
    %s18 = ssub.s32 %s12, 2
    %s25 = sadd.s32 1, %s20
    %p26 = scmp.ge.s32.totalorder %s25, 1
    %s27 = scalar_select %p26, 0, %s25
    %s28 = sadd.s32 1, %s19
    %s29 = scalar_select %p26, %s28, %s19
    %p30 = scmp.ge.s32.totalorder %s29, 2
    %s31 = scalar_select %p30, 0, %s29
    %s32 = sadd.s32 %s19, %s20
    %s33 = sadd.s32 %s31, %s27
    %s34 = ssub.s32 %s32, %s33
    %p35 = scmp.eq.s32.totalorder %s34, 0
    %s37 = sadd.s32 %s36, 1
    %s38 = scalar_select %p35, %s36, %s37
    %p41 = pneg %p35
    %p42 = scmp.eq.s32.totalorder %s12, 1
    %p43 = por %p41, %p42
    %p44 = scmp.ne.s32.totalorder %s36, %s39
    %p45 = scmp.eq.s32.totalorder %s12, 0
    %p46 = por %p44, %p45
    %p47 = scmp.ne.s32.totalorder %s36, %s39
    %p48 = scmp.eq.s32.totalorder %s17, 1
    %p49 = por %p47, %p48
    %p50 = scmp.ne.s32.totalorder %s39, %s40
    %p51 = scmp.eq.s32.totalorder %s17, 0
    %p52 = por %p50, %p51
    %p53 = scmp.ne.s32.totalorder %s39, %s40
    %p54 = scmp.eq.s32.totalorder %s18, 1
    %p55 = por %p53, %p54
    %p57 = scmp.ne.s32.totalorder %s40, %s56
    %p58 = scmp.eq.s32.totalorder %s18, 0
    %p59 = por %p57, %p58
    %s60 = sadd.s32 %s19, %s20
    %s61 = sadd.s32 %s31, %s27
    %s62 = ssub.s32 %s60, %s61
    %p63 = scmp.eq.s32.totalorder %s62, 0
    %s65 = sadd.s32 %s64, 1
    %s66 = scalar_select %p63, %s64, %s65
    %p69 = pneg %p63
    %p70 = scmp.eq.s32.totalorder %s12, 1
    %p71 = por %p69, %p70
    %p72 = scmp.ne.s32.totalorder %s64, %s67
    %p73 = scmp.eq.s32.totalorder %s12, 0
    %p74 = por %p72, %p73
    %p75 = scmp.ne.s32.totalorder %s64, %s67
    %p76 = scmp.eq.s32.totalorder %s17, 1
    %p77 = por %p75, %p76
    %p78 = scmp.ne.s32.totalorder %s67, %s68
    %p79 = scmp.eq.s32.totalorder %s17, 0
    %p80 = por %p78, %p79
    %p81 = scmp.ne.s32.totalorder %s67, %s68
    %p82 = scmp.eq.s32.totalorder %s18, 1
    %p83 = por %p81, %p82
    %p85 = scmp.ne.s32.totalorder %s68, %s84
    %p86 = scmp.eq.s32.totalorder %s18, 0
    %p87 = por %p85, %p86
    %s88 = sadd.s32 %s19, %s20
    %s89 = sadd.s32 %s31, %s27
    %s90 = ssub.s32 %s88, %s89
    %p91 = scmp.eq.s32.totalorder %s90, 0
    %s93 = sadd.s32 %s92, 1
    %s94 = scalar_select %p91, %s92, %s93
    %p97 = pneg %p91
    %p98 = scmp.eq.s32.totalorder %s12, 1
    %p99 = por %p97, %p98
    %p100 = scmp.ne.s32.totalorder %s92, %s95
    %p101 = scmp.eq.s32.totalorder %s12, 0
    %p102 = por %p100, %p101
    %p103 = scmp.ne.s32.totalorder %s92, %s95
    %p104 = scmp.eq.s32.totalorder %s17, 1
    %p105 = por %p103, %p104
    %p106 = scmp.ne.s32.totalorder %s95, %s96
    %p107 = scmp.eq.s32.totalorder %s17, 0
    %p108 = por %p106, %p107
    %p109 = scmp.ne.s32.totalorder %s95, %s96
    %p110 = scmp.eq.s32.totalorder %s18, 1
    %p111 = por %p109, %p110
    %p113 = scmp.ne.s32.totalorder %s96, %s112
    %p114 = scmp.eq.s32.totalorder %s18, 0
    %p115 = por %p113, %p114
    %s116 = sadd.s32 %s19, %s20
    %s117 = sadd.s32 %s31, %s27
    %s118 = ssub.s32 %s116, %s117
    %p119 = scmp.eq.s32.totalorder %s118, 0
    %s121 = sadd.s32 %s120, 1
    %s122 = scalar_select %p119, %s120, %s121
    %p125 = pneg %p119
    %p126 = scmp.eq.s32.totalorder %s12, 1
    %p127 = por %p125, %p126
    %p128 = scmp.ne.s32.totalorder %s120, %s123
    %p129 = scmp.eq.s32.totalorder %s12, 0
    %p130 = por %p128, %p129
    %p131 = scmp.ne.s32.totalorder %s120, %s123
    %p132 = scmp.eq.s32.totalorder %s17, 1
    %p133 = por %p131, %p132
    %p134 = scmp.ne.s32.totalorder %s123, %s124
    %p135 = scmp.eq.s32.totalorder %s17, 0
    %p136 = por %p134, %p135
    %p137 = scmp.ne.s32.totalorder %s123, %s124
    %p138 = scmp.eq.s32.totalorder %s18, 1
    %p139 = por %p137, %p138
    %p141 = scmp.ne.s32.totalorder %s124, %s140
    %p142 = scmp.eq.s32.totalorder %s18, 0
    %p143 = por %p141, %p142
    %s144 = ssub.s32 %s19, %s31
    %p145 = scmp.eq.s32.totalorder %s144, 0
    %s147 = sadd.s32 %s146, 1
    %s148 = scalar_select %p145, %s146, %s147
    %p151 = pneg %p145
    %p152 = scmp.eq.s32.totalorder %s12, 1
    %p153 = por %p151, %p152
    %p154 = scmp.ne.s32.totalorder %s146, %s149
    %p155 = scmp.eq.s32.totalorder %s12, 0
    %p156 = por %p154, %p155
    %p157 = scmp.ne.s32.totalorder %s146, %s149
    %p158 = scmp.eq.s32.totalorder %s17, 1
    %p159 = por %p157, %p158
    %p160 = scmp.ne.s32.totalorder %s149, %s150
    %p161 = scmp.eq.s32.totalorder %s17, 0
    %p162 = por %p160, %p161
    %p163 = scmp.ne.s32.totalorder %s149, %s150
    %p164 = scmp.eq.s32.totalorder %s18, 1
    %p165 = por %p163, %p164
    %p167 = scmp.ne.s32.totalorder %s150, %s166
    %p168 = scmp.eq.s32.totalorder %s18, 0
    %p169 = por %p167, %p168
    %s170 = ssub.s32 %s19, %s31
    %p171 = scmp.eq.s32.totalorder %s170, 0
    %s173 = sadd.s32 %s172, 1
    %s174 = scalar_select %p171, %s172, %s173
    %p177 = pneg %p171
    %p178 = scmp.eq.s32.totalorder %s12, 1
    %p179 = por %p177, %p178
    %p180 = scmp.ne.s32.totalorder %s172, %s175
    %p181 = scmp.eq.s32.totalorder %s12, 0
    %p182 = por %p180, %p181
    %p183 = scmp.ne.s32.totalorder %s172, %s175
    %p184 = scmp.eq.s32.totalorder %s17, 1
    %p185 = por %p183, %p184
    %p186 = scmp.ne.s32.totalorder %s175, %s176
    %p187 = scmp.eq.s32.totalorder %s17, 0
    %p188 = por %p186, %p187
    %p189 = scmp.ne.s32.totalorder %s175, %s176
    %p190 = scmp.eq.s32.totalorder %s18, 1
    %p191 = por %p189, %p190
    %p193 = scmp.ne.s32.totalorder %s176, %s192
    %p194 = scmp.eq.s32.totalorder %s18, 0
    %p195 = por %p193, %p194
    %p196 = scmp.le.s32.totalorder 1, %s12
    %p197 = scmp.lt.s32.totalorder %s12, 3
    %p198 = pnand %p196, %p197
    %p199 = pneg %p198
    // Predicated region
    $region9: #{value_loss.1} parent=5 // pred_check
      _
    $region10: #{value_loss.1} parent=5 // pred_check_branch
      %201 = sbr.rel (%p198) target = $region12
    $region11: #{value_loss.1} parent=5 // pred_region
      %s202 = ssub.s32 %s12, 1
    $region12: #{value_loss.1} parent=5 // pred_fallthru
      _
    %p203 = scmp.lt.s32.totalorder %s12, 2
    // Predicated region
    $region13: #{value_loss.1} parent=5 // pred_check
      %p204 = pneg %p203
    $region14: #{value_loss.1} parent=5 // pred_check_branch
      %206 = sbr.rel (%p204) target = $region16
    $region15: #{value_loss.1} parent=5 // pred_region
      // Predicated region
      $region17: #{value_loss.1} parent=15 // pred_check
        %p207 = pneg %p46
      $region18: #{value_loss.1} parent=15 // pred_check_branch
        %209 = sbr.rel (%p207) target = $region20
      $region19: #{value_loss.1} parent=15 // pred_region
        %s210 = sadd.s32 %s19, %s20
        %s211 = smul.u32 4, %s210
        %p212 = scmp.lt.s32.totalorder %s211, 7
        %s213 = scalar_select %p212, %s211, 7
        %s214 = smul.addr %s213, 8
        %s215 = scalar_lea.vmem %s0, %s214
        %s216 = sadd.s32 %s19, %s20
        %s217 = smul.u32 4, %s216
      $region20: #{value_loss.1} parent=15 // pred_fallthru
        _
      // Predicated region
      $region21: #{value_loss.1} parent=15 // pred_check
        %p218 = pneg %p74
      $region22: #{value_loss.1} parent=15 // pred_check_branch
        %220 = sbr.rel (%p218) target = $region24
      $region23: #{value_loss.1} parent=15 // pred_region
        %s221 = sadd.s32 %s19, %s20
        %s222 = smul.u32 4, %s221
        %p223 = scmp.lt.s32.totalorder %s222, 7
        %s224 = scalar_select %p223, %s222, 7
        %s225 = smul.addr %s224, 8
        %s226 = scalar_lea.vmem %s1, %s225
        %s227 = sadd.s32 %s19, %s20
        %s228 = smul.u32 4, %s227
      $region24: #{value_loss.1} parent=15 // pred_fallthru
        _
      // Predicated region
      $region25: #{value_loss.1} parent=15 // pred_check
        %p229 = pneg %p102
      $region26: #{value_loss.1} parent=15 // pred_check_branch
        %231 = sbr.rel (%p229) target = $region28
      $region27: #{value_loss.1} parent=15 // pred_region
        %s232 = sadd.s32 %s19, %s20
        %s233 = smul.u32 4, %s232
        %p234 = scmp.lt.s32.totalorder %s233, 7
        %s235 = scalar_select %p234, %s233, 7
        %s236 = smul.addr %s235, 8
        %s237 = scalar_lea.vmem %s2, %s236
        %s238 = sadd.s32 %s19, %s20
        %s239 = smul.u32 4, %s238
      $region28: #{value_loss.1} parent=15 // pred_fallthru
        _
      // Predicated region
      $region29: #{value_loss.1} parent=15 // pred_check
        %p240 = pneg %p130
      $region30: #{value_loss.1} parent=15 // pred_check_branch
        %242 = sbr.rel (%p240) target = $region32
      $region31: #{value_loss.1} parent=15 // pred_region
        %s243 = sadd.s32 %s19, %s20
        %s244 = smul.u32 4, %s243
        %p245 = scmp.lt.s32.totalorder %s244, 7
        %s246 = scalar_select %p245, %s244, 7
        %s247 = smul.addr %s246, 8
        %s248 = scalar_lea.vmem %s3, %s247
        %s249 = sadd.s32 %s19, %s20
        %s250 = smul.u32 4, %s249
      $region32: #{value_loss.1} parent=15 // pred_fallthru
        _
    $region16: #{value_loss.1} parent=5 // pred_fallthru
      _
    %p251 = scmp.le.s32.totalorder 1, %s12
    %p252 = scmp.lt.s32.totalorder %s12, 3
    %p253 = pnand %p251, %p252
    %p254 = pneg %p253
    // Predicated region
    $region33: #{value_loss.1} parent=5 // pred_check
      _
    $region34: #{value_loss.1} parent=5 // pred_check_branch
      %256 = sbr.rel (%p253) target = $region36
    $region35: #{value_loss.1} parent=5 // pred_region
      %s257 = ssub.s32 %s12, 1
      %s258 = sadd.s32 %s21, %s22
      %s259 = smul.u32 4, %s258
      %p260 = scmp.lt.s32.totalorder %s259, 7
      %s261 = scalar_select %p260, %s259, 7
      %s262 = smul.addr %s261, 8
      %s263 = scalar_lea.vmem %s0, %s262
      %p264 = pneg %p52
      %p265 = pneg %p49
      %s266 = sadd.s32 %s21, %s22
      %s267 = smul.u32 4, %s266
      %p268 = scmp.lt.s32.totalorder %s267, 7
      %s269 = scalar_select %p268, %s267, 7
      %s270 = smul.addr %s269, 8
      %s271 = scalar_lea.vmem %s1, %s270
      %p272 = pneg %p80
      %p273 = pneg %p77
      %s274 = sadd.s32 %s21, %s22
      %s275 = smul.u32 4, %s274
      %p276 = scmp.lt.s32.totalorder %s275, 7
      %s277 = scalar_select %p276, %s275, 7
      %s278 = smul.addr %s277, 8
      %s279 = scalar_lea.vmem %s2, %s278
      %p280 = pneg %p108
      %p281 = pneg %p105
      %s282 = sadd.s32 %s21, %s22
      %s283 = smul.u32 4, %s282
      %p284 = scmp.lt.s32.totalorder %s283, 7
      %s285 = scalar_select %p284, %s283, 7
      %s286 = smul.addr %s285, 8
      %s287 = scalar_lea.vmem %s3, %s286
      %p288 = pneg %p136
      %p289 = pneg %p133
      %p290 = pneg %p162
      %p291 = pneg %p159
      %p292 = scmp.lt.s32.totalorder %s21, 1
      %s293 = scalar_select %p292, %s21, 1
      %s294 = scalar_lea.vmem %s4, %s293
      %p295 = pneg %p188
      %p296 = pneg %p185
      %p297 = scmp.lt.s32.totalorder %s21, 1
      %s298 = scalar_select %p297, %s21, 1
      %s299 = scalar_lea.vmem %s5, %s298
      %s300 = sadd.s32 %s21, %s22
      %s301 = smul.u32 4, %s300
      %p302 = scmp.lt.s32.totalorder %s301, 7
      %s303 = scalar_select %p302, %s301, 7
      %s304 = smul.addr %s303, 8
      %s305 = scalar_lea.vmem %s0, %s304
      %s306 = sadd.s32 %s21, %s22
      %s307 = smul.u32 4, %s306
      %s308 = sadd.s32 %s21, %s22
      %s309 = smul.u32 4, %s308
      %p310 = scmp.lt.s32.totalorder %s309, 7
      %s311 = scalar_select %p310, %s309, 7
      %s312 = smul.addr %s311, 8
      %s313 = scalar_lea.vmem %s1, %s312
      %s314 = sadd.s32 %s21, %s22
      %s315 = smul.u32 4, %s314
      %s316 = sadd.s32 %s21, %s22
      %s317 = smul.u32 4, %s316
      %p318 = scmp.lt.s32.totalorder %s317, 7
      %s319 = scalar_select %p318, %s317, 7
      %s320 = smul.addr %s319, 8
      %s321 = scalar_lea.vmem %s2, %s320
      %s322 = sadd.s32 %s21, %s22
      %s323 = smul.u32 4, %s322
      %s324 = sadd.s32 %s21, %s22
      %s325 = smul.u32 4, %s324
      %p326 = scmp.lt.s32.totalorder %s325, 7
      %s327 = scalar_select %p326, %s325, 7
      %s328 = smul.addr %s327, 8
      %s329 = scalar_lea.vmem %s3, %s328
      %s330 = sadd.s32 %s21, %s22
      %s331 = smul.u32 4, %s330
      %p332 = scmp.lt.s32.totalorder %s21, 1
      %s333 = scalar_select %p332, %s21, 1
      %s334 = scalar_lea.vmem %s4, %s333
      %p335 = scmp.lt.s32.totalorder %s21, 1
      %s336 = scalar_select %p335, %s21, 1
      %s337 = scalar_lea.vmem %s5, %s336
      %p338 = scmp.eq.s32.totalorder %s22, 0
      // Predicated region
      $region37: #{value_loss.1} parent=35 // pred_check
        %p339 = pneg %p338
      $region38: #{value_loss.1} parent=35 // pred_check_branch
        %341 = sbr.rel (%p339) target = $region40
      $region39: #{value_loss.1} parent=35 // pred_region
        %342 = vst [vmem:[#allocation2] sm:$0xff] 0.0
        %343 = vst [vmem:[#allocation2 + $0x8] sm:$0xff] 0.0
        %344 = vst [vmem:[#allocation2 + $0x10] sm:$0xff] 0.0
        %345 = vst [vmem:[#allocation2 + $0x18] sm:$0xff] 0.0
        %346 = vst [vmem:[#allocation3] sm:$0xff] 0.0
        %347 = vst [vmem:[#allocation3 + $0x8] sm:$0xff] 0.0
        %348 = vst [vmem:[#allocation3 + $0x10] sm:$0xff] 0.0
        %349 = vst [vmem:[#allocation3 + $0x18] sm:$0xff] 0.0
      $region40: #{value_loss.1} parent=35 // pred_fallthru
        _
      %v350 = vld [vmem:[%s305] sm:$0xff]
      %v351 = vld [vmem:[%s305 + $0x8] sm:$0xff]
      %v352 = vld [vmem:[%s305 + $0x10] sm:$0xff]
      %v353 = vld [vmem:[%s305 + $0x18] sm:$0xff]
      %v354 = vld [vmem:[%s313] sm:$0xff]
      %v355 = vld [vmem:[%s313 + $0x8] sm:$0xff]
      %v356 = vld [vmem:[%s313 + $0x10] sm:$0xff]
      %v357 = vld [vmem:[%s313 + $0x18] sm:$0xff]
      %v358 = vld [vmem:[%s321] sm:$0xff]
      %v359 = vld [vmem:[%s321 + $0x8] sm:$0xff]
      %v360 = vld [vmem:[%s321 + $0x10] sm:$0xff]
      %v361 = vld [vmem:[%s321 + $0x18] sm:$0xff]
      %v362 = vld [vmem:[%s329] sm:$0xff]
      %v363 = vld [vmem:[%s329 + $0x8] sm:$0xff]
      %v364 = vld [vmem:[%s329 + $0x10] sm:$0xff]
      %v365 = vld [vmem:[%s329 + $0x18] sm:$0xff]
      %v366 = vadd.f32 %v358, %v354
      %v367 = vadd.f32 %v359, %v355
      %v368 = vadd.f32 %v360, %v356
      %v369 = vadd.f32 %v361, %v357
      %v370 = vsub.f32 %v350, %v354
      %v371 = vsub.f32 %v351, %v355
      %v372 = vsub.f32 %v352, %v356
      %v373 = vsub.f32 %v353, %v357
      %v374 = vmax.f32 %v370, -0.2
      %v375 = vmax.f32 %v371, -0.2
      %v376 = vmax.f32 %v372, -0.2
      %v377 = vmax.f32 %v373, -0.2
      %v378 = vmin.f32 %v374, 0.2
      %v379 = vmin.f32 %v375, 0.2
      %v380 = vmin.f32 %v376, 0.2
      %v381 = vmin.f32 %v377, 0.2
      %v382 = vadd.f32 %v354, %v378
      %v383 = vadd.f32 %v355, %v379
      %v384 = vadd.f32 %v356, %v380
      %v385 = vadd.f32 %v357, %v381
      %v386 = vsub.f32 %v382, %v366
      %v387 = vsub.f32 %v383, %v367
      %v388 = vsub.f32 %v384, %v368
      %v389 = vsub.f32 %v385, %v369
      %v390 = vmul.f32 %v386, %v386
      %v391 = vmul.f32 %v387, %v387
      %v392 = vmul.f32 %v388, %v388
      %v393 = vmul.f32 %v389, %v389
      %v394 = vsub.f32 %v350, %v366
      %v395 = vsub.f32 %v351, %v367
      %v396 = vsub.f32 %v352, %v368
      %v397 = vsub.f32 %v353, %v369
      %v398 = vmul.f32 %v394, %v394
      %v399 = vmul.f32 %v395, %v395
      %v400 = vmul.f32 %v396, %v396
      %v401 = vmul.f32 %v397, %v397
      %v402 = vmax.f32 %v390, %v398
      %v403 = vmax.f32 %v391, %v399
      %v404 = vmax.f32 %v392, %v400
      %v405 = vmax.f32 %v393, %v401
      %v406 = vld [vmem:[#allocation2] sm:$0xff]
      %v407 = vld [vmem:[#allocation2 + $0x8] sm:$0xff]
      %v408 = vld [vmem:[#allocation2 + $0x10] sm:$0xff]
      %v409 = vld [vmem:[#allocation2 + $0x18] sm:$0xff]
      %v410 = vmul.f32 %v402, %v362
      %v411 = vmul.f32 %v403, %v363
      %v412 = vmul.f32 %v404, %v364
      %v413 = vmul.f32 %v405, %v365
      %v414 = vadd.f32 %v406, %v410
      %v415 = vadd.f32 %v407, %v411
      %v416 = vadd.f32 %v408, %v412
      %v417 = vadd.f32 %v409, %v413
      %418 = vst [vmem:[#allocation2] sm:$0xff] %v414
      %419 = vst [vmem:[#allocation2 + $0x8] sm:$0xff] %v415
      %420 = vst [vmem:[#allocation2 + $0x10] sm:$0xff] %v416
      %421 = vst [vmem:[#allocation2 + $0x18] sm:$0xff] %v417
      %v422 = vld [vmem:[#allocation3] sm:$0xff]
      %v423 = vld [vmem:[#allocation3 + $0x8] sm:$0xff]
      %v424 = vld [vmem:[#allocation3 + $0x10] sm:$0xff]
      %v425 = vld [vmem:[#allocation3 + $0x18] sm:$0xff]
      %v426 = vadd.f32 %v422, %v362
      %v427 = vadd.f32 %v423, %v363
      %v428 = vadd.f32 %v424, %v364
      %v429 = vadd.f32 %v425, %v365
      %430 = vst [vmem:[#allocation3] sm:$0xff] %v426
      %431 = vst [vmem:[#allocation3 + $0x8] sm:$0xff] %v427
      %432 = vst [vmem:[#allocation3 + $0x10] sm:$0xff] %v428
      %433 = vst [vmem:[#allocation3 + $0x18] sm:$0xff] %v429
      // Predicated region
      $region41: #{value_loss.1} parent=35 // pred_check
        %p434 = pneg %p338
      $region42: #{value_loss.1} parent=35 // pred_check_branch
        %436 = sbr.rel (%p434) target = $region44
      $region43: #{value_loss.1} parent=35 // pred_region
        %v437 = vld [vmem:[#allocation2] sm:$0xff]
        %v438 = vld [vmem:[#allocation2 + $0x8] sm:$0xff]
        %v439 = vld [vmem:[#allocation2 + $0x10] sm:$0xff]
        %v440 = vld [vmem:[#allocation2 + $0x18] sm:$0xff]
        %v441 = vadd.f32 %v437, %v438
        %v442 = vadd.f32 %v441, %v439
        %v443 = vadd.f32 %v442, %v440
        %v444 = vrot.slane %v443, 4
        %v445 = vadd.f32 %v443, %v444
        %v446 = vrot.slane %v445, 2
        %v447 = vadd.f32 %v445, %v446
        %v448 = vrot.slane %v447, 1
        %v449 = vadd.f32 %v447, %v448
        %450 = vst [vmem:[%s334] sm:$0x1] %v449
        %v451 = vld [vmem:[#allocation3] sm:$0xff]
        %v452 = vld [vmem:[#allocation3 + $0x8] sm:$0xff]
        %v453 = vld [vmem:[#allocation3 + $0x10] sm:$0xff]
        %v454 = vld [vmem:[#allocation3 + $0x18] sm:$0xff]
        %v455 = vadd.f32 %v451, %v452
        %v456 = vadd.f32 %v455, %v453
        %v457 = vadd.f32 %v456, %v454
        %v458 = vrot.slane %v457, 4
        %v459 = vadd.f32 %v457, %v458
        %v460 = vrot.slane %v459, 2
        %v461 = vadd.f32 %v459, %v460
        %v462 = vrot.slane %v461, 1
        %v463 = vadd.f32 %v461, %v462
        %464 = vst [vmem:[%s337] sm:$0x1] %v463
      $region44: #{value_loss.1} parent=35 // pred_fallthru
        _
      %p465 = scmp.lt.s32.totalorder %s21, 1
      %s466 = scalar_select %p465, %s21, 1
      %s467 = scalar_lea.vmem %s4, %s466
      %p468 = scmp.lt.s32.totalorder %s21, 1
      %s469 = scalar_select %p468, %s21, 1
      %s470 = scalar_lea.vmem %s5, %s469
      // Predicated region
      $region45: #{value_loss.1} parent=35 // pred_check
        %p471 = pneg %p159
      $region46: #{value_loss.1} parent=35 // pred_check_branch
        %473 = sbr.rel (%p471) target = $region48
      $region47: #{value_loss.1} parent=35 // pred_region
        _
      $region48: #{value_loss.1} parent=35 // pred_fallthru
        _
      // Predicated region
      $region49: #{value_loss.1} parent=35 // pred_check
        %p474 = pneg %p185
      $region50: #{value_loss.1} parent=35 // pred_check_branch
        %476 = sbr.rel (%p474) target = $region52
      $region51: #{value_loss.1} parent=35 // pred_region
        _
      $region52: #{value_loss.1} parent=35 // pred_fallthru
        _
    $region36: #{value_loss.1} parent=5 // pred_fallthru
      _
    %p477 = scmp.le.s32.totalorder 2, %s12
    // Predicated region
    $region53: #{value_loss.1} parent=5 // pred_check
      %p478 = pneg %p477
    $region54: #{value_loss.1} parent=5 // pred_check_branch
      %480 = sbr.rel (%p478) target = $region56
    $region55: #{value_loss.1} parent=5 // pred_region
      %s481 = ssub.s32 %s12, 2
      // Predicated region
      $region57: #{value_loss.1} parent=55 // pred_check
        %p482 = pneg %p165
      $region58: #{value_loss.1} parent=55 // pred_check_branch
        %484 = sbr.rel (%p482) target = $region60
      $region59: #{value_loss.1} parent=55 // pred_region
        %p485 = scmp.lt.s32.totalorder %s23, 1
        %s486 = scalar_select %p485, %s23, 1
        %s487 = scalar_lea.vmem %s4, %s486
      $region60: #{value_loss.1} parent=55 // pred_fallthru
        _
      // Predicated region
      $region61: #{value_loss.1} parent=55 // pred_check
        %p488 = pneg %p191
      $region62: #{value_loss.1} parent=55 // pred_check_branch
        %490 = sbr.rel (%p488) target = $region64
      $region63: #{value_loss.1} parent=55 // pred_region
        %p491 = scmp.lt.s32.totalorder %s23, 1
        %s492 = scalar_select %p491, %s23, 1
        %s493 = scalar_lea.vmem %s5, %s492
      $region64: #{value_loss.1} parent=55 // pred_fallthru
        _
    $region56: #{value_loss.1} parent=5 // pred_fallthru
      _
  $region6: #{value_loss.1} parent=0 // loop_footer
    %s16 = sadd.s32 1, %s12
  $region7: #{value_loss.1} parent=0 // loop_footer_branch
    %11 = sbr.rel target = $region3
  $region8: #{value_loss.1} parent=0 // loop_exit
    _

</llo_original>
